<compile_context>
chip_gen: v7x
topology: tpu7x:2x2x1
jax: 0.10.0
libtpu: 0.0.40
codegen_flags: <defaults>
</compile_context>

<pallas_src>
import jax
import jax.numpy as jnp
from jax.experimental import pallas as pl
from jax.experimental.pallas import tpu as pltpu


def _linear_kernel(params_ref, xt_ref, o_ref):
    # params_ref: SMEM (3,) = [w00, w01, b0]
    # xt_ref:     VMEM (IN=2, Bt)  -- batch on the lane axis
    # o_ref:      VMEM (1, Bt)
    w0 = params_ref[0]
    w1 = params_ref[1]
    b0 = params_ref[2]
    y = xt_ref[0:1, :] * w0 + xt_ref[1:2, :] * w1 + b0
    o_ref[...] = y.astype(o_ref.dtype)


def linear_pallas(x, weight, bias, *, lane_tile=512):
    """y = x @ weight.T + bias  (same as torch nn.Linear(2, 1))."""
    B, IN = x.shape
    OUT = weight.shape[0]
    assert IN == 2 and OUT == 1, "kernel is specialized to nn.Linear(2, 1)"

    # Pack the 3 parameters into one tiny SMEM-resident array: [w00, w01, b0].
    params = jnp.concatenate(
        [weight.reshape(-1), bias.reshape(-1)]).astype(jnp.float32)

    # Batch on the lane axis (lane-dense loads & unmasked stores).
    xt = x.T  # (IN, B)

    if B > lane_tile and B % lane_tile == 0:
        # Large batch: tile the lane axis; "parallel" lets the two v7x
        # TensorCores (megacore) each take a share of the tiles.
        out = pl.pallas_call(
            _linear_kernel,
            out_shape=jax.ShapeDtypeStruct((1, B), x.dtype),
            grid=(B // lane_tile,),
            in_specs=[
                pl.BlockSpec(memory_space=pltpu.MemorySpace.SMEM),
                pl.BlockSpec((IN, lane_tile), lambda i: (0, i)),
            ],
            out_specs=pl.BlockSpec((1, lane_tile), lambda i: (0, i)),
            compiler_params=pltpu.CompilerParams(
                dimension_semantics=("parallel",)),
        )(params, xt)
    else:
        # Small batch: single shot, no grid, no per-step pipeline overhead.
        out = pl.pallas_call(
            _linear_kernel,
            out_shape=jax.ShapeDtypeStruct((1, B), x.dtype),
            in_specs=[
                pl.BlockSpec(memory_space=pltpu.MemorySpace.SMEM),
                pl.BlockSpec(memory_space=pltpu.MemorySpace.VMEM),
            ],
            out_specs=pl.BlockSpec(memory_space=pltpu.MemorySpace.VMEM),
        )(params, xt)

    return out.reshape(B, OUT)


def norm_col_init(key, shape, std=1.0):
    # Mirrors the PyTorch helper: x ~ N(0,1), scaled per-row so each row has
    # L2 norm == std (tiny epsilon guards the theoretical all-zero row).
    x = jax.random.normal(key, shape, dtype=jnp.float32)
    row_norm = jnp.sqrt(jnp.sum(x ** 2, axis=1, keepdims=True))
    return x * (std / jnp.maximum(row_norm, 1e-12))


def init_params(key):
    # MySubModel: fc = nn.Linear(2, 1); weight <- norm_col_init(std=0.01); bias <- 0
    w = norm_col_init(key, (1, 2), std=0.01)   # (out_features, in_features)
    b = jnp.zeros((1,), dtype=jnp.float32)
    return w, b


def my_model_forward(x, params):
    w, b = params
    return linear_pallas(x, w, b)


if __name__ == "__main__":
    key = jax.random.PRNGKey(0)
    k_w, k_x = jax.random.split(key)

    params = init_params(k_w)

    batch = 8
    x = jax.random.normal(k_x, (batch, 2), dtype=jnp.float32)

    y = my_model_forward(x, params)
    y = jax.block_until_ready(y)

    # Cross-check against plain JAX reference.
    w, b = params
    y_ref = x @ w.T + b
    assert y.shape == (batch, 1)
    assert jnp.allclose(y, y_ref, atol=1e-5), (y, y_ref)

    print("KERNEL_OK")
</pallas_src>

<mosaic_0001>
module attributes {stable_mosaic.version = 11 : i64} {
  func.func @_linear_kernel(%arg0: memref<3xf32, #tpu.memory_space<smem>>, %arg1: memref<2x8xf32, #tpu.memory_space<vmem>>, %arg2: memref<1x8xf32, #tpu.memory_space<vmem>>) attributes {dimension_semantics = [], scalar_prefetch = 0 : i64, scratch_operands = 0 : i64, tpu.core_type = #tpu.core_type<tc>} {
    %c0 = arith.constant 0 : index
    %0 = memref.load %arg0[%c0] : memref<3xf32, #tpu.memory_space<smem>>
    %c1 = arith.constant 1 : index
    %1 = memref.load %arg0[%c1] : memref<3xf32, #tpu.memory_space<smem>>
    %c2 = arith.constant 2 : index
    %2 = memref.load %arg0[%c2] : memref<3xf32, #tpu.memory_space<smem>>
    %c0_0 = arith.constant 0 : index
    %c0_1 = arith.constant 0 : index
    %3 = vector.load %arg1[%c0_0, %c0_1] : memref<2x8xf32, #tpu.memory_space<vmem>>, vector<1x8xf32>
    %4 = vector.broadcast %0 : f32 to vector<1x8xf32>
    %5 = arith.mulf %3, %4 : vector<1x8xf32>
    %c1_2 = arith.constant 1 : index
    %c0_3 = arith.constant 0 : index
    %6 = vector.load %arg1[%c1_2, %c0_3] : memref<2x8xf32, #tpu.memory_space<vmem>>, vector<1x8xf32>
    %7 = vector.broadcast %1 : f32 to vector<1x8xf32>
    %8 = arith.mulf %6, %7 : vector<1x8xf32>
    %9 = arith.addf %5, %8 : vector<1x8xf32>
    %10 = vector.broadcast %2 : f32 to vector<1x8xf32>
    %11 = arith.addf %9, %10 : vector<1x8xf32>
    %c0_4 = arith.constant 0 : index
    %c0_5 = arith.constant 0 : index
    %12 = vector.load %arg2[%c0_4, %c0_5] : memref<1x8xf32, #tpu.memory_space<vmem>>, vector<1x8xf32>
    tpu.vector_store %arg2[%c0_4, %c0_5], %11 {strides = array<i32>} : memref<1x8xf32, #tpu.memory_space<vmem>>, vector<1x8xf32>,
    return
  }
}

</mosaic_0001>

<llo_original>
// kernel: tpu_custom_call.1
$region0: #{tpu_custom_call.1}
  #allocation0 [shape = 'u32[]', space=smem, size = 0x4, offset = 0x4, fixed_abs, tag = 'smem constant byte address 0x4 - core index']
  #allocation1 [shape = 'u32[144,128]{1,0:T(1,128)}', space=vmem, size = 0x12000, scoped, tag = 'internal scratch']
  %s0 = inlined_call_operand.hbm [shape: f32[3], index: 0, kind: input, shape index: {}]
  %s1 = inlined_call_operand.vmem [shape: f32[2,8], index: 1, kind: input, shape index: {}]
  %s2 = inlined_call_operand.hbm [shape: f32[1,8], index: 2, kind: output, shape index: {}]
  %s3 = sld [smem:[#allocation0]]
  $region22: #{tpu_custom_call.1} parent=0
    _
  %s5 = ssub.s32 1, %s3
  %s6 = scalar_select 0, %s5, %s3
  $region1: #{tpu_custom_call.1} parent=0
    #allocation2 [shape = 'u8[512]{0}', space=smem, size = 0x200, scoped, tag = 'input window, operand 0, single buffered']
    #allocation3 [shape = 's32[1]{0}', space=sflag, size = 0x4, scoped, tag = 'scoped memory for tpu_custom_call.1']
    #allocation4 [shape = 's32[1]{0}', space=sflag, size = 0x4, scoped, tag = 'scoped memory for tpu_custom_call.1']
    #allocation5 [shape = 'u8[512]{0}', space=vmem, size = 0x400, scoped, tag = 'output window, operand 0, single buffered']
    %7 = vsyncpa [#allocation4], 0
    %8 = vsyncpa [#allocation3], 0
    // Predicated region
    $region2: #{tpu_custom_call.1} parent=1 // pred_check
      _
    $region3: #{tpu_custom_call.1} parent=1 // pred_check_branch
      %10 = sbr.rel (0) target = $region5
    $region4: #{tpu_custom_call.1} parent=1 // pred_region
      %s12 = ssub.s32 16, 16
      %13 = vsyncadd [#allocation4], %s12
      %16 = dma.hbm_to_smem %s0, 16, [#allocation2], [#allocation4]
    $region5: #{tpu_custom_call.1} parent=1 // pred_fallthru
      _
    // Predicated region
    $region6: #{tpu_custom_call.1} parent=1 // pred_check
      _
    $region7: #{tpu_custom_call.1} parent=1 // pred_check_branch
      %18 = sbr.rel (0) target = $region9
    $region8: #{tpu_custom_call.1} parent=1 // pred_region
      _
    $region9: #{tpu_custom_call.1} parent=1 // pred_fallthru
      _
    // Predicated region
    $region10: #{tpu_custom_call.1} parent=1 // pred_check
      _
    $region11: #{tpu_custom_call.1} parent=1 // pred_check_branch
      %20 = sbr.rel (0) target = $region13
    $region12: #{tpu_custom_call.1} parent=1 // pred_region
      %21 = dma.done [#allocation4], 16
    $region13: #{tpu_custom_call.1} parent=1 // pred_fallthru
      _
    %22 = sfence
    %s23 = sld [smem:[#allocation2]]
    %s24 = sld [smem:[#allocation2 + $0x1]]
    %s25 = sld [smem:[#allocation2 + $0x2]]
    %v26 = vld [vmem:[%s1] sm:$0x1]
    %v27 = vstv %s23
    %v28 = vmul.f32 %v26, %v27
    %v29 = vld [vmem:[%s1 + $0x1] sm:$0x1]
    %v30 = vstv %s24
    %v31 = vmul.f32 %v29, %v30
    %v32 = vadd.f32 %v28, %v31
    %v33 = vstv %s25
    %v34 = vadd.f32 %v32, %v33
    %vm35 = vcmask 57344
    %36 = vst.msk [vmem:[#allocation5] sm:$0x1] %vm35, %v34
    // Predicated region
    $region14: #{tpu_custom_call.1} parent=1 // pred_check
      _
    $region15: #{tpu_custom_call.1} parent=1 // pred_check_branch
      %38 = sbr.rel (0) target = $region17
    $region16: #{tpu_custom_call.1} parent=1 // pred_region
      %s40 = ssub.s32 16, 16
      %41 = vsyncadd [#allocation3], %s40
      %s43 = sshll.u32 [#allocation5], 4
      %s44 = int_to_ptr.vmem [resolvable:$true] %s43
      %46 = dma.vmem_to_hbm [thread:$0]  %s44, 16, %s2, [#allocation3]
    $region17: #{tpu_custom_call.1} parent=1 // pred_fallthru
      _
    // Predicated region
    $region18: #{tpu_custom_call.1} parent=1 // pred_check
      _
    $region19: #{tpu_custom_call.1} parent=1 // pred_check_branch
      %48 = sbr.rel (0) target = $region21
    $region20: #{tpu_custom_call.1} parent=1 // pred_region
      %49 = dma.done [#allocation3], 16
    $region21: #{tpu_custom_call.1} parent=1 // pred_fallthru
      _
    %50 = vsyncpa [#allocation3], 1
    %51 = vsyncpa [#allocation4], 1

</llo_original>
